<compile_context>
chip_gen: v6e
topology: v6e:2x2x1
jax: 0.10.0
libtpu: 0.0.40
codegen_flags: <defaults>
</compile_context>

<pallas_src>
import jax
import jax.numpy as jnp
from jax import lax
from jax.experimental import pallas as pl
from jax.experimental.pallas import tpu as pltpu


def _round_up(n, m):
    return ((n + m - 1) // m) * m


# ----------------------- parameter fusion (wrapper-side, done once) ----------

def fuse_rnn_head_params(w_i2h, b_i2h, w_i2o, b_i2o, w_o2o, b_o2o):
    """Pre-fuse the three Linear layers into the kernel-friendly form.

      W1x, W1h : (H, H+L) -- the two halves of concat([w_i2h, w_i2o], axis=1),
                 so the kernel does x @ W1x + h @ W1h (no lane concat).
      b1       : (1, H+L)
      W2, b2   : augmented o2o: slab = t @ W2 + b2 gives
                 slab[:, :H] = t[:, :H] (= hidden, identity pass-through) and
                 slab[:, H:] = t @ w_o2o + b_o2o (= final output).
    """
    H = w_i2h.shape[1]
    L = w_i2o.shape[1]
    dt = w_i2h.dtype

    W1 = jnp.concatenate([w_i2h, w_i2o], axis=1)                     # (2H, H+L)
    W1x, W1h = W1[:H], W1[H:]                                        # (H, H+L) each
    b1 = jnp.concatenate([b_i2h, b_i2o], axis=1)                     # (1, H+L)

    top = jnp.concatenate([jnp.eye(H, dtype=dt), w_o2o[:H]], axis=1)   # (H, H+L)
    bot = jnp.concatenate([jnp.zeros((L, H), dt), w_o2o[H:]], axis=1)  # (L, H+L)
    W2 = jnp.concatenate([top, bot], axis=0)                           # (H+L, H+L)
    b2 = jnp.concatenate([jnp.zeros((1, H), dt), b_o2o], axis=1)       # (1, H+L)
    return W1x, W1h, b1, W2, b2


# ----------------------- single-step kernel (module forward) -----------------

def rnn_head_kernel(x_ref, h_ref, w1x_ref, w1h_ref, b1_ref, w2_ref, b2_ref,
                    slab_ref):
    # t = tanh(cat(x, h) @ W1 + b1)  == [hidden | tanh(i2o(combined))]
    t = jnp.tanh(
        jnp.dot(x_ref[...], w1x_ref[...], preferred_element_type=jnp.float32)
        + jnp.dot(h_ref[...], w1h_ref[...], preferred_element_type=jnp.float32)
        + b1_ref[...])                                               # (Bp, H+L)
    # One matmul produces the fused output slab [hidden | o2o(output_combined)].
    slab_ref[...] = (jnp.dot(t, w2_ref[...],
                             preferred_element_type=jnp.float32)
                     + b2_ref[...]).astype(slab_ref.dtype)


@jax.jit
def rnn_head_forward(x, h, w1x, w1h, b1, w2, b2):
    """Single-step RNNHead forward: returns (output, new_hidden)."""
    B, H = x.shape
    HL = w1x.shape[1]
    B_pad = max(8, _round_up(B, 8))

    # Fill the sublane dimension: pad batch rows to a multiple of 8.
    xp = jnp.zeros((B_pad, H), x.dtype).at[:B].set(x)
    hp = jnp.zeros((B_pad, H), h.dtype).at[:B].set(h)

    slab = pl.pallas_call(
        rnn_head_kernel,
        out_shape=jax.ShapeDtypeStruct((B_pad, HL), x.dtype),
        in_specs=[pl.BlockSpec(memory_space=pltpu.VMEM)] * 7,
        out_specs=pl.BlockSpec(memory_space=pltpu.VMEM),
    )(xp, hp, w1x, w1h, b1, w2, b2)

    return slab[:B, H:], slab[:B, :H]          # (output, hidden)


# ----------------------- whole-sequence kernel (recurrence in-kernel) --------

def rnn_head_seq_kernel(x_ref, h0_ref, w1x_ref, w1h_ref, b1_ref, w2_ref, b2_ref,
                        slab_ref, h_scr):
    H = h0_ref.shape[-1]

    @pl.when(pl.program_id(0) == 0)
    def _():
        h_scr[...] = h0_ref[...]

    t = jnp.tanh(
        jnp.dot(x_ref[...], w1x_ref[...], preferred_element_type=jnp.float32)
        + jnp.dot(h_scr[...], w1h_ref[...], preferred_element_type=jnp.float32)
        + b1_ref[...])                                               # (Bp, H+L)
    slab_ref[...] = (jnp.dot(t, w2_ref[...],
                             preferred_element_type=jnp.float32)
                     + b2_ref[...]).astype(slab_ref.dtype)
    h_scr[...] = t[:, :H]                      # hidden stays resident in VMEM


@jax.jit
def rnn_head_sequence_forward(xs, h0, w1x, w1h, b1, w2, b2):
    """Runs the RNNHead recurrence over all T steps inside one pallas_call.

    Returns (outputs (T,B,L), hiddens (T,B,H))."""
    T, B, H = xs.shape
    HL = w1x.shape[1]
    B_pad = max(8, _round_up(B, 8))

    xsp = jnp.zeros((T, B_pad, H), xs.dtype).at[:, :B].set(xs)
    h0p = jnp.zeros((B_pad, H), h0.dtype).at[:B].set(h0)

    slab = pl.pallas_call(
        rnn_head_seq_kernel,
        out_shape=jax.ShapeDtypeStruct((T, B_pad, HL), xs.dtype),
        grid=(T,),
        in_specs=[
            pl.BlockSpec((None, B_pad, H), lambda t: (t, 0, 0)),   # x_t streamed
            pl.BlockSpec((B_pad, H), lambda t: (0, 0)),            # h0 (step 0)
            pl.BlockSpec((H, HL), lambda t: (0, 0)),               # W1x
            pl.BlockSpec((H, HL), lambda t: (0, 0)),               # W1h
            pl.BlockSpec((1, HL), lambda t: (0, 0)),               # b1
            pl.BlockSpec((HL, HL), lambda t: (0, 0)),              # W2
            pl.BlockSpec((1, HL), lambda t: (0, 0)),               # b2
        ],
        out_specs=pl.BlockSpec((None, B_pad, HL), lambda t: (t, 0, 0)),
        scratch_shapes=[pltpu.VMEM((B_pad, H), jnp.float32)],      # resident hidden
        compiler_params=pltpu.CompilerParams(
            dimension_semantics=("arbitrary",)),                   # recurrence
    )(xsp, h0p, w1x, w1h, b1, w2, b2)

    outputs = slab[:, :B, H:]
    hiddens = slab[:, :B, :H]
    return outputs, hiddens


# ----------------------- reference (pure JAX, un-fused weights) --------------

def init_linear(key, in_features, out_features, dtype=jnp.float32):
    """Deterministic torch-style init; W stored as (in, out), b as (1, out)."""
    kw, kb = jax.random.split(key)
    bound = 1.0 / (in_features ** 0.5)
    w = jax.random.uniform(kw, (in_features, out_features), dtype,
                           minval=-bound, maxval=bound)
    b = jax.random.uniform(kb, (1, out_features), dtype,
                           minval=-bound, maxval=bound)
    return w, b


def reference_forward(x, h, w_i2h, b_i2h, w_i2o, b_i2o, w_o2o, b_o2o):
    combined = jnp.concatenate([x, h], axis=1)
    hidden = jnp.tanh(combined @ w_i2h + b_i2h)
    output = jnp.tanh(combined @ w_i2o + b_i2o)
    oc = jnp.concatenate([hidden, output], axis=1)
    out = oc @ w_o2o + b_o2o
    return out, hidden


def reference_sequence(xs, h0, *params):
    def step(h, x):
        out, h_new = reference_forward(x, h, *params)
        return h_new, (out, h_new)
    _, (outs, hs) = lax.scan(step, h0, xs)
    return outs, hs


if __name__ == "__main__":
    # Small config consistent with the module: hidden_size=32, num_labels=8,
    # batch=2, sequence length T=8 for the fused-recurrence kernel.
    B, H, L, T = 2, 32, 8, 8

    key = jax.random.PRNGKey(0)
    k_xs, k_h, k1, k2, k3 = jax.random.split(key, 5)

    xs = jax.random.normal(k_xs, (T, B, H), jnp.float32)      # sequence of "input"
    x = xs[0]                                                 # single-step "input"
    hidden0 = jax.random.normal(k_h, (B, H), jnp.float32)     # "hidden"

    # i2h: Linear(2H -> H), i2o: Linear(2H -> L), o2o: Linear(H+L -> L)
    w_i2h, b_i2h = init_linear(k1, 2 * H, H)
    w_i2o, b_i2o = init_linear(k2, 2 * H, L)
    w_o2o, b_o2o = init_linear(k3, H + L, L)
    raw_params = (w_i2h, b_i2h, w_i2o, b_i2o, w_o2o, b_o2o)

    # Fuse weights once (wrapper-side preprocessing).
    W1x, W1h, b1, W2, b2 = fuse_rnn_head_params(*raw_params)

    # --- single-step forward (matches the module's forward) ---
    out, hidden_new = rnn_head_forward(x, hidden0, W1x, W1h, b1, W2, b2)
    jax.block_until_ready((out, hidden_new))

    out_ref, hidden_ref = reference_forward(x, hidden0, *raw_params)
    assert out.shape == (B, L) and hidden_new.shape == (B, H)
    assert jnp.allclose(out, out_ref, atol=1e-5, rtol=1e-5)
    assert jnp.allclose(hidden_new, hidden_ref, atol=1e-5, rtol=1e-5)

    # --- whole-sequence forward (recurrence inside one kernel) ---
    outs, hiddens = rnn_head_sequence_forward(xs, hidden0, W1x, W1h, b1, W2, b2)
    jax.block_until_ready((outs, hiddens))

    outs_ref, hiddens_ref = reference_sequence(xs, hidden0, *raw_params)
    assert outs.shape == (T, B, L) and hiddens.shape == (T, B, H)
    assert jnp.allclose(outs, outs_ref, atol=1e-4, rtol=1e-4)
    assert jnp.allclose(hiddens, hiddens_ref, atol=1e-4, rtol=1e-4)

    print("KERNEL_OK")
</pallas_src>

<mosaic_0001>
module attributes {stable_mosaic.version = 11 : i64} {
  func.func @rnn_head_kernel(%arg0: memref<8x32xf32, #tpu.memory_space<vmem>>, %arg1: memref<8x32xf32, #tpu.memory_space<vmem>>, %arg2: memref<32x40xf32, #tpu.memory_space<vmem>>, %arg3: memref<32x40xf32, #tpu.memory_space<vmem>>, %arg4: memref<1x40xf32, #tpu.memory_space<vmem>>, %arg5: memref<40x40xf32, #tpu.memory_space<vmem>>, %arg6: memref<1x40xf32, #tpu.memory_space<vmem>>, %arg7: memref<8x40xf32, #tpu.memory_space<vmem>>) attributes {dimension_semantics = [], scalar_prefetch = 0 : i64, scratch_operands = 0 : i64, tpu.core_type = #tpu.core_type<tc>} {
    %c0 = arith.constant 0 : index
    %c0_0 = arith.constant 0 : index
    %0 = vector.load %arg0[%c0, %c0_0] : memref<8x32xf32, #tpu.memory_space<vmem>>, vector<8x32xf32>
    %c0_1 = arith.constant 0 : index
    %c0_2 = arith.constant 0 : index
    %1 = vector.load %arg2[%c0_1, %c0_2] : memref<32x40xf32, #tpu.memory_space<vmem>>, vector<32x40xf32>
    %cst = arith.constant dense<0.000000e+00> : vector<8x40xf32>
    %2 = tpu.matmul %0, %1, %cst {dimension_numbers = #tpu.dot_dimension_numbers<[1], [0], [0], [1], [0, 0, 1, 1], [], []>} : vector<8x32xf32>, vector<32x40xf32>, vector<8x40xf32> -> vector<8x40xf32>
    %c0_3 = arith.constant 0 : index
    %c0_4 = arith.constant 0 : index
    %3 = vector.load %arg1[%c0_3, %c0_4] : memref<8x32xf32, #tpu.memory_space<vmem>>, vector<8x32xf32>
    %c0_5 = arith.constant 0 : index
    %c0_6 = arith.constant 0 : index
    %4 = vector.load %arg3[%c0_5, %c0_6] : memref<32x40xf32, #tpu.memory_space<vmem>>, vector<32x40xf32>
    %cst_7 = arith.constant dense<0.000000e+00> : vector<8x40xf32>
    %5 = tpu.matmul %3, %4, %cst_7 {dimension_numbers = #tpu.dot_dimension_numbers<[1], [0], [0], [1], [0, 0, 1, 1], [], []>} : vector<8x32xf32>, vector<32x40xf32>, vector<8x40xf32> -> vector<8x40xf32>
    %6 = arith.addf %2, %5 : vector<8x40xf32>
    %c0_8 = arith.constant 0 : index
    %c0_9 = arith.constant 0 : index
    %7 = vector.load %arg4[%c0_8, %c0_9] : memref<1x40xf32, #tpu.memory_space<vmem>>, vector<1x40xf32>
    %8 = vector.broadcast %7 : vector<1x40xf32> to vector<8x40xf32>
    %9 = arith.addf %6, %8 : vector<8x40xf32>
    %10 = math.tanh %9 : vector<8x40xf32>
    %c0_10 = arith.constant 0 : index
    %c0_11 = arith.constant 0 : index
    %11 = vector.load %arg5[%c0_10, %c0_11] : memref<40x40xf32, #tpu.memory_space<vmem>>, vector<40x40xf32>
    %cst_12 = arith.constant dense<0.000000e+00> : vector<8x40xf32>
    %12 = tpu.matmul %10, %11, %cst_12 {dimension_numbers = #tpu.dot_dimension_numbers<[1], [0], [0], [1], [0, 0, 1, 1], [], []>} : vector<8x40xf32>, vector<40x40xf32>, vector<8x40xf32> -> vector<8x40xf32>
    %c0_13 = arith.constant 0 : index
    %c0_14 = arith.constant 0 : index
    %13 = vector.load %arg6[%c0_13, %c0_14] : memref<1x40xf32, #tpu.memory_space<vmem>>, vector<1x40xf32>
    %14 = vector.broadcast %13 : vector<1x40xf32> to vector<8x40xf32>
    %15 = arith.addf %12, %14 : vector<8x40xf32>
    %c0_15 = arith.constant 0 : index
    %c0_16 = arith.constant 0 : index
    %16 = vector.load %arg7[%c0_15, %c0_16] : memref<8x40xf32, #tpu.memory_space<vmem>>, vector<8x40xf32>
    tpu.vector_store %arg7[%c0_15, %c0_16], %15 {strides = array<i32>} : memref<8x40xf32, #tpu.memory_space<vmem>>, vector<8x40xf32>,
    return
  }
}

</mosaic_0001>

<llo_original>
// kernel: rnn_head_forward.1
$region0: #{rnn_head_forward.1}
  #allocation0 [shape = 'u32[]', space=smem, size = 0x4, offset = 0x4, fixed_abs, tag = 'smem constant byte address 0x4 - core index']
  #allocation1 [shape = 'u32[144,128]{1,0:T(1,128)}', space=vmem, size = 0x12000, scoped, tag = 'internal scratch']
  %s0 = inlined_call_operand.vmem [shape: f32[8,32], index: 0, kind: input, shape index: {}]
  %s1 = inlined_call_operand.vmem [shape: f32[8,32], index: 1, kind: input, shape index: {}]
  %s2 = inlined_call_operand.hbm [shape: f32[32,40], index: 2, kind: input, shape index: {}]
  %s3 = inlined_call_operand.hbm [shape: f32[32,40], index: 3, kind: input, shape index: {}]
  %s4 = inlined_call_operand.vmem [shape: f32[1,40], index: 4, kind: input, shape index: {}]
  %s5 = inlined_call_operand.hbm [shape: f32[40,40], index: 5, kind: input, shape index: {}]
  %s6 = inlined_call_operand.vmem [shape: f32[1,40], index: 6, kind: input, shape index: {}]
  %s7 = inlined_call_operand.vmem [shape: f32[8,40], index: 7, kind: output, shape index: {}]
  %s8 = sld [smem:[#allocation0]]
  $region50: #{rnn_head_forward.1} parent=0
    _
  %s10 = ssub.s32 1, %s8
  %s11 = scalar_select 0, %s10, %s8
  $region1: #{rnn_head_forward.1} parent=0
    #allocation2 [shape = 'u8[16384]{0}', space=vmem, size = 0x4000, scoped, tag = 'input window, operand 2, single buffered']
    #allocation3 [shape = 's32[1]{0}', space=sflag, size = 0x4, scoped, tag = 'scoped memory for rnn_head_forward.1']
    #allocation4 [shape = 'u8[16384]{0}', space=vmem, size = 0x4000, scoped, tag = 'input window, operand 3, single buffered']
    #allocation5 [shape = 's32[1]{0}', space=sflag, size = 0x4, scoped, tag = 'scoped memory for rnn_head_forward.1']
    #allocation6 [shape = 'u8[20480]{0}', space=vmem, size = 0x5000, scoped, tag = 'input window, operand 5, single buffered']
    %12 = vsyncpa [#allocation3], 0
    %13 = vsyncpa [#allocation5], 0
    // Predicated region
    $region2: #{rnn_head_forward.1} parent=1 // pred_check
      _
    $region3: #{rnn_head_forward.1} parent=1 // pred_check_branch
      %15 = sbr.rel (0) target = $region5
    $region4: #{rnn_head_forward.1} parent=1 // pred_region
      _
    $region5: #{rnn_head_forward.1} parent=1 // pred_fallthru
      _
    // Predicated region
    $region6: #{rnn_head_forward.1} parent=1 // pred_check
      _
    $region7: #{rnn_head_forward.1} parent=1 // pred_check_branch
      %17 = sbr.rel (0) target = $region9
    $region8: #{rnn_head_forward.1} parent=1 // pred_region
      _
    $region9: #{rnn_head_forward.1} parent=1 // pred_fallthru
      _
    // Predicated region
    $region10: #{rnn_head_forward.1} parent=1 // pred_check
      _
    $region11: #{rnn_head_forward.1} parent=1 // pred_check_branch
      %19 = sbr.rel (0) target = $region13
    $region12: #{rnn_head_forward.1} parent=1 // pred_region
      %s21 = ssub.s32 512, 512
      %22 = vsyncadd [#allocation3], %s21
      %s23 = sshll.u32 [#allocation2], 4
      %s24 = int_to_ptr.vmem [resolvable:$true] %s23
      %29 = dma.hbm_to_vmem [thread:$0]  %s2, 512, %s24, [#allocation3], 128, 128, 8
    $region13: #{rnn_head_forward.1} parent=1 // pred_fallthru
      _
    // Predicated region
    $region14: #{rnn_head_forward.1} parent=1 // pred_check
      _
    $region15: #{rnn_head_forward.1} parent=1 // pred_check_branch
      %31 = sbr.rel (0) target = $region17
    $region16: #{rnn_head_forward.1} parent=1 // pred_region
      %s33 = ssub.s32 512, 512
      %34 = vsyncadd [#allocation5], %s33
      %s35 = sshll.u32 [#allocation4], 4
      %s36 = int_to_ptr.vmem [resolvable:$true] %s35
      %41 = dma.hbm_to_vmem [thread:$0]  %s3, 512, %s36, [#allocation5], 128, 128, 8
    $region17: #{rnn_head_forward.1} parent=1 // pred_fallthru
      _
    // Predicated region
    $region18: #{rnn_head_forward.1} parent=1 // pred_check
      _
    $region19: #{rnn_head_forward.1} parent=1 // pred_check_branch
      %43 = sbr.rel (0) target = $region21
    $region20: #{rnn_head_forward.1} parent=1 // pred_region
      _
    $region21: #{rnn_head_forward.1} parent=1 // pred_fallthru
      _
    // Predicated region
    $region22: #{rnn_head_forward.1} parent=1 // pred_check
      _
    $region23: #{rnn_head_forward.1} parent=1 // pred_check_branch
      %45 = sbr.rel (0) target = $region25
    $region24: #{rnn_head_forward.1} parent=1 // pred_region
      %s47 = ssub.s32 640, 640
      %48 = vsyncadd [#allocation5], %s47
      %s49 = sshll.u32 [#allocation6], 4
      %s50 = int_to_ptr.vmem [resolvable:$true] %s49
      %55 = dma.hbm_to_vmem [thread:$0]  %s5, 640, %s50, [#allocation5], 128, 128, 8
    $region25: #{rnn_head_forward.1} parent=1 // pred_fallthru
      _
    // Predicated region
    $region26: #{rnn_head_forward.1} parent=1 // pred_check
      _
    $region27: #{rnn_head_forward.1} parent=1 // pred_check_branch
      %57 = sbr.rel (0) target = $region29
    $region28: #{rnn_head_forward.1} parent=1 // pred_region
      _
    $region29: #{rnn_head_forward.1} parent=1 // pred_fallthru
      _
    // Predicated region
    $region30: #{rnn_head_forward.1} parent=1 // pred_check
      _
    $region31: #{rnn_head_forward.1} parent=1 // pred_check_branch
      %59 = sbr.rel (0) target = $region33
    $region32: #{rnn_head_forward.1} parent=1 // pred_region
      %60 = dma.done [#allocation3], 512
    $region33: #{rnn_head_forward.1} parent=1 // pred_fallthru
      _
    // Predicated region
    $region34: #{rnn_head_forward.1} parent=1 // pred_check
      _
    $region35: #{rnn_head_forward.1} parent=1 // pred_check_branch
      %62 = sbr.rel (0) target = $region37
    $region36: #{rnn_head_forward.1} parent=1 // pred_region
      %63 = dma.done [#allocation5], 512
    $region37: #{rnn_head_forward.1} parent=1 // pred_fallthru
      _
    // Predicated region
    $region38: #{rnn_head_forward.1} parent=1 // pred_check
      _
    $region39: #{rnn_head_forward.1} parent=1 // pred_check_branch
      %65 = sbr.rel (0) target = $region41
    $region40: #{rnn_head_forward.1} parent=1 // pred_region
      %66 = dma.done [#allocation5], 640
    $region41: #{rnn_head_forward.1} parent=1 // pred_fallthru
      _
    %v67 = vld [vmem:[%s0] sm:$0xff]
    %v68 = vld [vmem:[#allocation2] sm:$0xff]
    %v69 = vld [vmem:[#allocation2 + $0x8] sm:$0xff]
    %v70 = vld [vmem:[#allocation2 + $0x10] sm:$0xff]
    %v71 = vld [vmem:[#allocation2 + $0x18] sm:$0xff]
    %v72 = vld [vmem:[%s1] sm:$0xff]
    %v73 = vld [vmem:[#allocation4] sm:$0xff]
    %v74 = vld [vmem:[#allocation4 + $0x8] sm:$0xff]
    %v75 = vld [vmem:[#allocation4 + $0x10] sm:$0xff]
    %v76 = vld [vmem:[#allocation4 + $0x18] sm:$0xff]
    %vm77 = vcmask 261120
    %v79 = vsel %vm77, %v72, 0
    %81 = vmatprep.subr.mxu0 0.0
    %82 = vmatpush1.msra.mxu0 0.0
    %83 = vmatprep.subr.mxu0 0.0
    %84 = vmatpush1.msra.mxu0 0.0
    %85 = vmatprep.subr.mxu0 0.0
    %86 = vmatpush1.msra.mxu0 0.0
    %87 = vmatprep.subr.mxu0 0.0
    %88 = vmatpush1.msra.mxu0 0.0
    %89 = vmatprep.subr.mxu0 0.0
    %90 = vmatpush1.msra.mxu0 0.0
    %91 = vmatprep.subr.mxu0 0.0
    %92 = vmatpush1.msra.mxu0 0.0
    %93 = vmatprep.subr.mxu0 0.0
    %94 = vmatpush1.msra.mxu0 0.0
    %95 = vmatprep.subr.mxu0 0.0
    %96 = vmatpush1.msra.mxu0 0.0
    %97 = vmatprep.subr.mxu0 0.0
    %98 = vmatpush1.msra.mxu0 0.0
    %99 = vmatprep.subr.mxu0 0.0
    %100 = vmatpush1.msra.mxu0 0.0
    %101 = vmatprep.subr.mxu0 0.0
    %102 = vmatpush1.msra.mxu0 0.0
    %103 = vmatprep.subr.mxu0 0.0
    %104 = vmatpush1.msra.mxu0 0.0
    %105 = vmatprep.subr.mxu0 0.0
    %106 = vmatpush1.msra.mxu0 %v76
    %107 = vmatprep.subr.mxu0 0.0
    %108 = vmatpush1.msra.mxu0 %v75
    %109 = vmatprep.subr.mxu0 0.0
    %110 = vmatpush1.msra.mxu0 %v74
    %111 = vmatprep.subr.mxu0 0.0
    %112 = vmatpush1.msra.mxu0 %v73
    %113 = vmatprep.subr.mxu0 0.0
    %114 = vmatpush2.msra.mxu0 0.0
    %115 = vmatprep.subr.mxu0 0.0
    %116 = vmatpush2.msra.mxu0 0.0
    %117 = vmatprep.subr.mxu0 0.0
    %118 = vmatpush2.msra.mxu0 0.0
    %119 = vmatprep.subr.mxu0 0.0
    %120 = vmatpush2.msra.mxu0 0.0
    %121 = vmatprep.subr.mxu0 0.0
    %122 = vmatpush2.msra.mxu0 0.0
    %123 = vmatprep.subr.mxu0 0.0
    %124 = vmatpush2.msra.mxu0 0.0
    %125 = vmatprep.subr.mxu0 0.0
    %126 = vmatpush2.msra.mxu0 0.0
    %127 = vmatprep.subr.mxu0 0.0
    %128 = vmatpush2.msra.mxu0 0.0
    %129 = vmatprep.subr.mxu0 0.0
    %130 = vmatpush2.msra.mxu0 0.0
    %131 = vmatprep.subr.mxu0 0.0
    %132 = vmatpush2.msra.mxu0 0.0
    %133 = vmatprep.subr.mxu0 0.0
    %134 = vmatpush2.msra.mxu0 0.0
    %135 = vmatprep.subr.mxu0 0.0
    %136 = vmatpush2.msra.mxu0 0.0
    %137 = vmatprep.subr.mxu0 0.0
    %138 = vmatpush2.msra.mxu0 0.0
    %139 = vmatprep.subr.mxu0 0.0
    %140 = vmatpush2.msra.mxu0 0.0
    %141 = vmatprep.subr.mxu0 0.0
    %142 = vmatpush2.msra.mxu0 0.0
    %143 = vmatprep.subr.mxu0 0.0
    %144 = vmatpush2.msra.mxu0 0.0
    %145 = vmatprep.mubr.f32.mxu0 0.0
    %146 = vmatmul.mubr.f32.gmra.mxu0 %v79
    %v147 = vpop.f32.mrf.mxu0
    %v148 = vadd.f32 0.0, %v147
    %v149 = vpop.f32.mrf.mxu0
    %150 = vdwg.mxu0
    %v152 = vsel %vm77, %v67, 0
    %154 = vmatprep.subr.mxu0 0.0
    %155 = vmatpush1.msra.mxu0 0.0
    %156 = vmatprep.subr.mxu0 0.0
    %157 = vmatpush1.msra.mxu0 0.0
    %158 = vmatprep.subr.mxu0 0.0
    %159 = vmatpush1.msra.mxu0 0.0
    %160 = vmatprep.subr.mxu0 0.0
    %161 = vmatpush1.msra.mxu0 0.0
    %162 = vmatprep.subr.mxu0 0.0
    %163 = vmatpush1.msra.mxu0 0.0
    %164 = vmatprep.subr.mxu0 0.0
    %165 = vmatpush1.msra.mxu0 0.0
    %166 = vmatprep.subr.mxu0 0.0
    %167 = vmatpush1.msra.mxu0 0.0
    %168 = vmatprep.subr.mxu0 0.0
    %169 = vmatpush1.msra.mxu0 0.0
    %170 = vmatprep.subr.mxu0 0.0
    %171 = vmatpush1.msra.mxu0 0.0
    %172 = vmatprep.subr.mxu0 0.0
    %173 = vmatpush1.msra.mxu0 0.0
    %174 = vmatprep.subr.mxu0 0.0
    %175 = vmatpush1.msra.mxu0 0.0
    %176 = vmatprep.subr.mxu0 0.0
    %177 = vmatpush1.msra.mxu0 0.0
    %178 = vmatprep.subr.mxu0 0.0
    %179 = vmatpush1.msra.mxu0 %v71
    %180 = vmatprep.subr.mxu0 0.0
    %181 = vmatpush1.msra.mxu0 %v70
    %182 = vmatprep.subr.mxu0 0.0
    %183 = vmatpush1.msra.mxu0 %v69
    %184 = vmatprep.subr.mxu0 0.0
    %185 = vmatpush1.msra.mxu0 %v68
    %186 = vmatprep.subr.mxu0 0.0
    %187 = vmatpush2.msra.mxu0 0.0
    %188 = vmatprep.subr.mxu0 0.0
    %189 = vmatpush2.msra.mxu0 0.0
    %190 = vmatprep.subr.mxu0 0.0
    %191 = vmatpush2.msra.mxu0 0.0
    %192 = vmatprep.subr.mxu0 0.0
    %193 = vmatpush2.msra.mxu0 0.0
    %194 = vmatprep.subr.mxu0 0.0
    %195 = vmatpush2.msra.mxu0 0.0
    %196 = vmatprep.subr.mxu0 0.0
    %197 = vmatpush2.msra.mxu0 0.0
    %198 = vmatprep.subr.mxu0 0.0
    %199 = vmatpush2.msra.mxu0 0.0
    %200 = vmatprep.subr.mxu0 0.0
    %201 = vmatpush2.msra.mxu0 0.0
    %202 = vmatprep.subr.mxu0 0.0
    %203 = vmatpush2.msra.mxu0 0.0
    %204 = vmatprep.subr.mxu0 0.0
    %205 = vmatpush2.msra.mxu0 0.0
    %206 = vmatprep.subr.mxu0 0.0
    %207 = vmatpush2.msra.mxu0 0.0
    %208 = vmatprep.subr.mxu0 0.0
    %209 = vmatpush2.msra.mxu0 0.0
    %210 = vmatprep.subr.mxu0 0.0
    %211 = vmatpush2.msra.mxu0 0.0
    %212 = vmatprep.subr.mxu0 0.0
    %213 = vmatpush2.msra.mxu0 0.0
    %214 = vmatprep.subr.mxu0 0.0
    %215 = vmatpush2.msra.mxu0 0.0
    %216 = vmatprep.subr.mxu0 0.0
    %217 = vmatpush2.msra.mxu0 0.0
    %218 = vmatprep.mubr.f32.mxu0 0.0
    %219 = vmatmul.mubr.f32.gmra.mxu0 %v152
    %v220 = vpop.f32.mrf.mxu0
    %v221 = vadd.f32 %v148, %v220
    %v222 = vpop.f32.mrf.mxu0
    %223 = vdwg.mxu0
    %v224 = vld [vmem:[%s4] sm:$0x1]
    %v226 = vlaneseq
    %v227 = vshrl.u32 %v226, 7
    %v228 = vsub.s32 0, %v227
    %v229 = vrot.slane %v224, %v228
    %v231 = vadd.f32 %v221, %v229
    %v232 = vtanh.pop %v231
    %v233 = vld [vmem:[#allocation6] sm:$0xff]
    %v234 = vld [vmem:[#allocation6 + $0x8] sm:$0xff]
    %v235 = vld [vmem:[#allocation6 + $0x10] sm:$0xff]
    %v236 = vld [vmem:[#allocation6 + $0x18] sm:$0xff]
    %v237 = vld [vmem:[#allocation6 + $0x20] sm:$0xff]
    %v238 = vld [vmem:[%s6] sm:$0x1]
    %v240 = vlaneseq
    %v241 = vshrl.u32 %v240, 7
    %v242 = vsub.s32 0, %v241
    %v243 = vrot.slane %v238, %v242
    %vm245 = vcmask 326656
    %v247 = vsel %vm245, %v232, 0
    %249 = vmatprep.subr.mxu0 0.0
    %250 = vmatpush1.msra.mxu0 0.0
    %251 = vmatprep.subr.mxu0 0.0
    %252 = vmatpush1.msra.mxu0 0.0
    %253 = vmatprep.subr.mxu0 0.0
    %254 = vmatpush1.msra.mxu0 0.0
    %255 = vmatprep.subr.mxu0 0.0
    %256 = vmatpush1.msra.mxu0 0.0
    %257 = vmatprep.subr.mxu0 0.0
    %258 = vmatpush1.msra.mxu0 0.0
    %259 = vmatprep.subr.mxu0 0.0
    %260 = vmatpush1.msra.mxu0 0.0
    %261 = vmatprep.subr.mxu0 0.0
    %262 = vmatpush1.msra.mxu0 0.0
    %263 = vmatprep.subr.mxu0 0.0
    %264 = vmatpush1.msra.mxu0 0.0
    %265 = vmatprep.subr.mxu0 0.0
    %266 = vmatpush1.msra.mxu0 0.0
    %267 = vmatprep.subr.mxu0 0.0
    %268 = vmatpush1.msra.mxu0 0.0
    %269 = vmatprep.subr.mxu0 0.0
    %270 = vmatpush1.msra.mxu0 0.0
    %271 = vmatprep.subr.mxu0 0.0
    %272 = vmatpush1.msra.mxu0 %v237
    %273 = vmatprep.subr.mxu0 0.0
    %274 = vmatpush1.msra.mxu0 %v236
    %275 = vmatprep.subr.mxu0 0.0
    %276 = vmatpush1.msra.mxu0 %v235
    %277 = vmatprep.subr.mxu0 0.0
    %278 = vmatpush1.msra.mxu0 %v234
    %279 = vmatprep.subr.mxu0 0.0
    %280 = vmatpush1.msra.mxu0 %v233
    %281 = vmatprep.subr.mxu0 0.0
    %282 = vmatpush2.msra.mxu0 0.0
    %283 = vmatprep.subr.mxu0 0.0
    %284 = vmatpush2.msra.mxu0 0.0
    %285 = vmatprep.subr.mxu0 0.0
    %286 = vmatpush2.msra.mxu0 0.0
    %287 = vmatprep.subr.mxu0 0.0
    %288 = vmatpush2.msra.mxu0 0.0
    %289 = vmatprep.subr.mxu0 0.0
    %290 = vmatpush2.msra.mxu0 0.0
    %291 = vmatprep.subr.mxu0 0.0
    %292 = vmatpush2.msra.mxu0 0.0
    %293 = vmatprep.subr.mxu0 0.0
    %294 = vmatpush2.msra.mxu0 0.0
    %295 = vmatprep.subr.mxu0 0.0
    %296 = vmatpush2.msra.mxu0 0.0
    %297 = vmatprep.subr.mxu0 0.0
    %298 = vmatpush2.msra.mxu0 0.0
    %299 = vmatprep.subr.mxu0 0.0
    %300 = vmatpush2.msra.mxu0 0.0
    %301 = vmatprep.subr.mxu0 0.0
    %302 = vmatpush2.msra.mxu0 0.0
    %303 = vmatprep.subr.mxu0 0.0
    %304 = vmatpush2.msra.mxu0 0.0
    %305 = vmatprep.subr.mxu0 0.0
    %306 = vmatpush2.msra.mxu0 0.0
    %307 = vmatprep.subr.mxu0 0.0
    %308 = vmatpush2.msra.mxu0 0.0
    %309 = vmatprep.subr.mxu0 0.0
    %310 = vmatpush2.msra.mxu0 0.0
    %311 = vmatprep.subr.mxu0 0.0
    %312 = vmatpush2.msra.mxu0 0.0
    %313 = vmatprep.mubr.f32.mxu0 0.0
    %314 = vmatmul.mubr.f32.gmra.mxu0 %v247
    %v315 = vpop.f32.mrf.mxu0
    %v316 = vadd.f32 %v243, %v315
    %v317 = vpop.f32.mrf.mxu0
    %318 = vdwg.mxu0
    %319 = vst.msk [vmem:[%s7] sm:$0xff] %vm245, %v316
    // Predicated region
    $region42: #{rnn_head_forward.1} parent=1 // pred_check
      _
    $region43: #{rnn_head_forward.1} parent=1 // pred_check_branch
      %321 = sbr.rel (0) target = $region45
    $region44: #{rnn_head_forward.1} parent=1 // pred_region
      _
    $region45: #{rnn_head_forward.1} parent=1 // pred_fallthru
      _
    // Predicated region
    $region46: #{rnn_head_forward.1} parent=1 // pred_check
      _
    $region47: #{rnn_head_forward.1} parent=1 // pred_check_branch
      %323 = sbr.rel (0) target = $region49
    $region48: #{rnn_head_forward.1} parent=1 // pred_region
      _
    $region49: #{rnn_head_forward.1} parent=1 // pred_fallthru
      _
    %324 = vsyncpa [#allocation3], 1
    %325 = vsyncpa [#allocation5], 1

</llo_original>
